<compile_context>
chip_gen: v7x
topology: tpu7x:2x2x1
jax: 0.10.0
libtpu: 0.0.40
codegen_flags: <defaults>
</compile_context>

<pallas_src>
import functools

import jax
import jax.numpy as jnp
import numpy as np
from jax import lax
from jax.experimental import pallas as pl
from jax.experimental.pallas import tpu as pltpu


# --------------------------- tuning constants ------------------------------ #

def _budgets():
    """Generation-aware (block_budget_bytes, vmem_limit_bytes)."""
    block = 8 * 1024 * 1024          # v7x-safe: 2 bufs x (in+out) ~= 32 MiB
    limit = 48 * 1024 * 1024         # < 64 MiB physical VMEM per TC on v7x
    try:
        vmem = pltpu.get_tpu_info().vmem_capacity_bytes
        if vmem >= 128 * 1024 * 1024:        # v5e / v6e: plenty of headroom
            block = 12 * 1024 * 1024
            limit = 64 * 1024 * 1024
    except Exception:
        pass                                  # CPU / interpret / unknown: defaults
    return block, limit


_BLOCK_BUDGET, _VMEM_LIMIT = _budgets()
_TINY_THRESHOLD = 65536                       # below this, plain XLA is already optimal

_ELEMENTWISE = ("sigmoid", "tanh")
_CHANNEL_SOFTMAX = ("softmax", "softmax2d", "logsoftmax")
_CHANNEL_ARGMAX = ("argmax", "argmax2d")


# ------------------------------- kernels ----------------------------------- #

def _elementwise_kernel(x_ref, o_ref, *, name):
    """Elementwise activation on a lane/sublane-dense 2D tile, native dtype."""
    x = x_ref[...]
    if name == "sigmoid":
        # NOTE: if a bundle dump ever shows EUP saturating on v7x, rewrite as
        # 0.5*(tanh(0.5*x)+1) (one EUP push). Memory-bound today, so keep simple.
        y = jax.nn.sigmoid(x)
    elif name == "tanh":
        y = jnp.tanh(x)
    else:
        raise ValueError(f"unsupported elementwise activation: {name}")
    o_ref[...] = y.astype(o_ref.dtype)


def _channel_softmax_kernel(x_ref, o_ref, *, log):
    """(log-)softmax over the channel (axis=1) of a (BN, C, TL) tile."""
    x = x_ref[...].astype(jnp.float32)
    m = jnp.max(x, axis=1, keepdims=True)
    e = jnp.exp(x - m)
    s = jnp.sum(e, axis=1, keepdims=True)
    if log:
        y = (x - m) - jnp.log(s)
    else:
        y = e / s                              # exact division (HBM-bound anyway)
    o_ref[...] = y.astype(o_ref.dtype)


def _channel_argmax_kernel(x_ref, o_ref):
    """Channel argmax (first maximal index) on a (BN, C, TL) tile -> (BN, TL)."""
    x = x_ref[...]
    C = x.shape[1]
    m = jnp.max(x, axis=1, keepdims=True)
    iota = lax.broadcasted_iota(jnp.int32, x.shape, 1)
    big = jnp.iinfo(jnp.int32).max
    idx = jnp.min(jnp.where(x == m, iota, big), axis=1)
    idx = jnp.minimum(idx, C - 1)              # NaN-only slice guard: keep index valid
    o_ref[...] = idx.astype(jnp.int32)


def _lane_softmax_kernel(x_ref, o_ref, *, log):
    """(log-)softmax over the last (lane) axis of a (BR, C) tile."""
    x = x_ref[...].astype(jnp.float32)
    m = jnp.max(x, axis=-1, keepdims=True)
    e = jnp.exp(x - m)
    s = jnp.sum(e, axis=-1, keepdims=True)
    if log:
        y = (x - m) - jnp.log(s)
    else:
        y = e / s
    o_ref[...] = y.astype(o_ref.dtype)


def _lane_argmax_kernel(x_ref, o_ref):
    """Argmax over the last (lane) axis of a (BR, C) tile -> (BR, 1)."""
    x = x_ref[...]
    C = x.shape[-1]
    m = jnp.max(x, axis=-1, keepdims=True)
    iota = lax.broadcasted_iota(jnp.int32, x.shape, x.ndim - 1)
    big = jnp.iinfo(jnp.int32).max
    idx = jnp.min(jnp.where(x == m, iota, big), axis=-1, keepdims=True)
    idx = jnp.minimum(idx, C - 1)
    o_ref[...] = idx.astype(jnp.int32)


# ----------------------------- tile selection ------------------------------- #

def _pick_lane_tile(L, sublane_rows, itemsize):
    """TL (multiple of 128, or == L) so a (sublane_rows, TL) slab fits the budget."""
    if L % 128 != 0:
        return L                               # full-dim block; caller pads large ragged L
    max_tl = max(128, (_BLOCK_BUDGET // max(1, sublane_rows * itemsize)) // 128 * 128)
    return int(min(L, max_tl))


def _pick_rows(R, per_row_bytes, *, sublane_constrained):
    """Row-block size: fill the budget; multiple of 8 when the block is sliced."""
    br = max(1, int(_BLOCK_BUDGET // max(1, per_row_bytes)))
    if br >= R:
        return R
    if sublane_constrained:
        br = max(8, (br // 8) * 8)
    return br


def _split_rows_for_two_cores(R, br):
    """If the grid would be a single step, halve the row block (v7x has 2 TCs)."""
    if pl.cdiv(R, br) < 2 and R >= 16:
        return max(8, ((R // 2 + 7) // 8) * 8)
    return br


# ------------------------------ pallas paths -------------------------------- #

def _elementwise_pallas(x, name):
    total = int(x.size)
    dtype = x.dtype
    itemsize = jnp.dtype(dtype).itemsize
    kernel = functools.partial(_elementwise_kernel, name=name)

    cols = None
    for c in (1024, 512, 256, 128):
        if total % c == 0:
            cols = c
            break

    pad = 0
    if cols is None:
        # Ragged total: pad the flat view to a lane-dense layout so it can still
        # be tiled/pipelined instead of loading one whole-array block.
        cols = 512
        pad = (-total) % cols
        flat = jnp.pad(x.reshape(-1), (0, pad))
    else:
        flat = x.reshape(-1)

    rows = (total + pad) // cols
    if rows >= 8:
        cap = max(8, (_BLOCK_BUDGET // (cols * itemsize)) // 8 * 8)
        br = min(max(8, (rows // 8) * 8), cap)
        br = _split_rows_for_two_cores(rows, br)
    else:
        br = rows                               # == full dim (legal)

    x2 = flat.reshape(rows, cols)
    out2 = pl.pallas_call(
        kernel,
        out_shape=jax.ShapeDtypeStruct((rows, cols), dtype),
        grid=(pl.cdiv(rows, br),),
        in_specs=[pl.BlockSpec((br, cols), lambda i: (i, 0))],
        out_specs=pl.BlockSpec((br, cols), lambda i: (i, 0)),
        compiler_params=pltpu.CompilerParams(
            dimension_semantics=("parallel",),
            vmem_limit_bytes=_VMEM_LIMIT),
    )(x2)
    out_flat = out2.reshape(-1)
    if pad:
        out_flat = out_flat[:total]
    return out_flat.reshape(x.shape)


def _maybe_pad_lanes(x3, C, L, itemsize):
    """Pad L to a multiple of 128 only when a full-L block would blow the budget."""
    if L % 128 != 0 and C * L * itemsize > _BLOCK_BUDGET:
        pad = (-L) % 128
        return jnp.pad(x3, ((0, 0), (0, 0), (0, pad))), L + pad
    return x3, L


def _channel_softmax_pallas(x3, name):
    N, C, L = x3.shape
    dtype = x3.dtype
    itemsize = jnp.dtype(dtype).itemsize
    L_orig = L
    x3, L = _maybe_pad_lanes(x3, C, L, itemsize)

    tl = _pick_lane_tile(L, C, itemsize)
    bn = min(N, max(1, int(_BLOCK_BUDGET // max(1, C * tl * itemsize))))

    # Make sure the grid has >= 2 steps so v7x can shard across its 2 TCs.
    if pl.cdiv(N, bn) * pl.cdiv(L, tl) < 2:
        if tl % 256 == 0:
            tl //= 2
        elif bn >= 2:
            bn = (bn + 1) // 2

    kernel = functools.partial(_channel_softmax_kernel, log=(name == "logsoftmax"))
    out = pl.pallas_call(
        kernel,
        out_shape=jax.ShapeDtypeStruct((N, C, L), dtype),
        grid=(pl.cdiv(N, bn), pl.cdiv(L, tl)),
        in_specs=[pl.BlockSpec((bn, C, tl), lambda n, l: (n, 0, l))],
        out_specs=pl.BlockSpec((bn, C, tl), lambda n, l: (n, 0, l)),
        compiler_params=pltpu.CompilerParams(
            dimension_semantics=("parallel", "parallel"),
            vmem_limit_bytes=_VMEM_LIMIT),
    )(x3)
    if L != L_orig:
        out = out[:, :, :L_orig]
    return out


def _channel_argmax_pallas(x3):
    N, C, L = x3.shape
    itemsize = jnp.dtype(x3.dtype).itemsize
    L_orig = L
    x3, L = _maybe_pad_lanes(x3, C, L, itemsize)

    tl = _pick_lane_tile(L, C, itemsize)
    bn = max(1, int(_BLOCK_BUDGET // max(1, C * tl * itemsize)))
    if bn >= N:
        bn = N
    else:
        bn = max(8, (bn // 8) * 8)              # output block: sublane dim constraint

    if pl.cdiv(N, bn) * pl.cdiv(L, tl) < 2:
        if tl % 256 == 0:
            tl //= 2
        elif bn >= 16 and bn % 16 == 0:
            bn //= 2

    out = pl.pallas_call(
        _channel_argmax_kernel,
        out_shape=jax.ShapeDtypeStruct((N, L), jnp.int32),
        grid=(pl.cdiv(N, bn), pl.cdiv(L, tl)),
        in_specs=[pl.BlockSpec((bn, C, tl), lambda n, l: (n, 0, l))],
        out_specs=pl.BlockSpec((bn, tl), lambda n, l: (n, l)),
        compiler_params=pltpu.CompilerParams(
            dimension_semantics=("parallel", "parallel"),
            vmem_limit_bytes=_VMEM_LIMIT),
    )(x3)
    if L != L_orig:
        out = out[:, :L_orig]
    return out


def _lane_softmax_pallas(x2, name):
    R, C = x2.shape
    dtype = x2.dtype
    itemsize = jnp.dtype(dtype).itemsize
    br = _pick_rows(R, C * itemsize, sublane_constrained=True)
    br = _split_rows_for_two_cores(R, br)
    kernel = functools.partial(_lane_softmax_kernel, log=(name == "logsoftmax"))
    return pl.pallas_call(
        kernel,
        out_shape=jax.ShapeDtypeStruct((R, C), dtype),
        grid=(pl.cdiv(R, br),),
        in_specs=[pl.BlockSpec((br, C), lambda i: (i, 0))],
        out_specs=pl.BlockSpec((br, C), lambda i: (i, 0)),
        compiler_params=pltpu.CompilerParams(
            dimension_semantics=("parallel",),
            vmem_limit_bytes=_VMEM_LIMIT),
    )(x2)


def _lane_argmax_pallas(x2):
    R, C = x2.shape
    itemsize = jnp.dtype(x2.dtype).itemsize
    br = _pick_rows(R, C * itemsize, sublane_constrained=True)
    br = _split_rows_for_two_cores(R, br)
    return pl.pallas_call(
        _lane_argmax_kernel,
        out_shape=jax.ShapeDtypeStruct((R, 1), jnp.int32),
        grid=(pl.cdiv(R, br),),
        in_specs=[pl.BlockSpec((br, C), lambda i: (i, 0))],
        out_specs=pl.BlockSpec((br, 1), lambda i: (i, 0)),
        compiler_params=pltpu.CompilerParams(
            dimension_semantics=("parallel",),
            vmem_limit_bytes=_VMEM_LIMIT),
    )(x2)


# -------------------------------- wrapper ----------------------------------- #

def activation(x, name, dim=1, *, force_pallas=False):
    """Pallas equivalent of Activation(name)(x).

    Supported names: None/'identity', 'sigmoid', 'tanh', 'softmax2d',
    'softmax' (dim), 'logsoftmax' (dim), 'argmax' (dim), 'argmax2d'.
    """
    if callable(name):
        # TODO(synk): arbitrary callable activation modules have no generic
        # Pallas equivalent; not implemented.
        raise NotImplementedError("callable activation modules are not supported")

    if name in (None, "identity"):
        return x                                # zero-cost short circuit

    if name in ("softmax2d", "argmax2d"):
        dim = 1

    use_pallas = force_pallas or int(x.size) >= _TINY_THRESHOLD

    if name in _ELEMENTWISE:
        if not use_pallas:
            return jax.nn.sigmoid(x) if name == "sigmoid" else jnp.tanh(x)
        return _elementwise_pallas(x, name)

    if name in _CHANNEL_SOFTMAX or name in _CHANNEL_ARGMAX:
        nd = x.ndim
        d = dim if dim >= 0 else dim + nd

        if not use_pallas:
            if name in _CHANNEL_ARGMAX:
                return jnp.argmax(x, axis=d).astype(jnp.int32)
            if name == "logsoftmax":
                return jax.nn.log_softmax(x, axis=d)
            return jax.nn.softmax(x, axis=d)

        shape = x.shape
        C = shape[d]

        if d == nd - 1:
            # Reduction over the last axis: pure reshape, reduce along lanes.
            R = int(np.prod(shape[:-1])) if nd > 1 else 1
            x2 = x.reshape(R, C)
            if name in _CHANNEL_ARGMAX:
                return _lane_argmax_pallas(x2).reshape(shape[:-1])
            return _lane_softmax_pallas(x2, name).reshape(shape)

        # Reduction over a leading/middle axis: fold leading dims into N and
        # trailing dims into L (pure reshapes, no transpose); reduce on axis 1.
        N = int(np.prod(shape[:d])) if d > 0 else 1
        L = int(np.prod(shape[d + 1:]))
        x3 = x.reshape(N, C, L)
        if name in _CHANNEL_ARGMAX:
            return _channel_argmax_pallas(x3).reshape(shape[:d] + shape[d + 1:])
        return _channel_softmax_pallas(x3, name).reshape(shape)

    raise ValueError(
        "Activation should be callable/sigmoid/softmax/logsoftmax/tanh/None; "
        f"got {name}")


# --------------------------------- main ------------------------------------- #

if __name__ == "__main__":
    key = jax.random.PRNGKey(0)
    N, C, H, W = 2, 4, 16, 16
    x = jax.random.normal(key, (N, C, H, W), dtype=jnp.float32)

    # identity: short-circuit (no kernel)
    y_id = jax.block_until_ready(activation(x, "identity"))
    assert jnp.allclose(y_id, x)

    # force_pallas=True so the small test shapes actually exercise the kernels.
    y_sig = jax.block_until_ready(activation(x, "sigmoid", force_pallas=True))
    assert jnp.allclose(y_sig, jax.nn.sigmoid(x), atol=1e-5)

    y_tanh = jax.block_until_ready(activation(x, "tanh", force_pallas=True))
    assert jnp.allclose(y_tanh, jnp.tanh(x), atol=1e-5)

    # softmax2d (channel softmax, exact division)
    y_sm2d = jax.block_until_ready(activation(x, "softmax2d", force_pallas=True))
    assert jnp.allclose(y_sm2d, jax.nn.softmax(x, axis=1), atol=1e-5)

    # softmax over the last dim exercises the lane-reduction path (no transpose).
    y_sm3 = jax.block_until_ready(activation(x, "softmax", dim=3, force_pallas=True))
    assert jnp.allclose(y_sm3, jax.nn.softmax(x, axis=3), atol=1e-5)

    y_lsm = jax.block_until_ready(activation(x, "logsoftmax", dim=1, force_pallas=True))
    assert jnp.allclose(y_lsm, jax.nn.log_softmax(x, axis=1), atol=1e-5)

    # argmax2d -> (N, H, W) int32
    y_am = jax.block_until_ready(activation(x, "argmax2d", force_pallas=True))
    assert y_am.shape == (N, H, W)
    assert jnp.array_equal(y_am, jnp.argmax(x, axis=1).astype(jnp.int32))

    # argmax over a middle dim (folded N/L, no transpose)
    y_am2 = jax.block_until_ready(activation(x, "argmax", dim=2, force_pallas=True))
    assert y_am2.shape == (N, C, W)
    assert jnp.array_equal(y_am2, jnp.argmax(x, axis=2).astype(jnp.int32))

    # ragged-size elementwise input exercises the pad+tile fallback
    x_r = jax.random.normal(key, (3, 5, 7), dtype=jnp.float32)
    y_r = jax.block_until_ready(activation(x_r, "tanh", force_pallas=True))
    assert jnp.allclose(y_r, jnp.tanh(x_r), atol=1e-5)

    # tiny-tensor fallback path (no Pallas) sanity check
    y_small = jax.block_until_ready(activation(x, "sigmoid"))
    assert jnp.allclose(y_small, jax.nn.sigmoid(x), atol=1e-6)

    print("KERNEL_OK")
</pallas_src>

<mosaic_0001>
module attributes {stable_mosaic.version = 11 : i64} {
  func.func @_elementwise_kernel(%arg0: i32, %arg1: memref<2x1024xf32, #tpu.memory_space<vmem>>, %arg2: memref<2x1024xf32, #tpu.memory_space<vmem>>) attributes {dimension_semantics = [#tpu.dimension_semantics<parallel>], iteration_bounds = array<i64: 1>, scalar_prefetch = 0 : i64, scratch_operands = 0 : i64, tpu.core_type = #tpu.core_type<tc>, window_params = [{transform_indices = @transform_0, window_bounds = array<i64: 2, 1024>}, {transform_indices = @transform_1, window_bounds = array<i64: 2, 1024>}]} {
    %c0 = arith.constant 0 : index
    %c0_0 = arith.constant 0 : index
    %0 = vector.load %arg1[%c0, %c0_0] : memref<2x1024xf32, #tpu.memory_space<vmem>>, vector<2x1024xf32>
    %1 = arith.negf %0 : vector<2x1024xf32>
    %2 = math.exp %1 : vector<2x1024xf32>
    %cst = arith.constant 1.000000e+00 : f32
    %3 = vector.broadcast %cst : f32 to vector<2x1024xf32>
    %4 = arith.addf %3, %2 : vector<2x1024xf32>
    %5 = arith.divf %3, %4 : vector<2x1024xf32>
    %c0_1 = arith.constant 0 : index
    %c0_2 = arith.constant 0 : index
    %6 = vector.load %arg2[%c0_1, %c0_2] : memref<2x1024xf32, #tpu.memory_space<vmem>>, vector<2x1024xf32>
    tpu.vector_store %arg2[%c0_1, %c0_2], %5 {strides = array<i32>} : memref<2x1024xf32, #tpu.memory_space<vmem>>, vector<2x1024xf32>,
    return
  }
  func.func @transform_0(%arg0: i32) -> (i32, i32) {
    %c0_i32 = arith.constant 0 : i32
    %c0_i32_0 = arith.constant 0 : i32
    return %arg0, %c0_i32 : i32, i32
  }
  func.func @transform_1(%arg0: i32) -> (i32, i32) {
    %c0_i32 = arith.constant 0 : i32
    %c0_i32_0 = arith.constant 0 : i32
    return %arg0, %c0_i32 : i32, i32
  }
}

</mosaic_0001>

<llo_original>
// kernel: tpu_custom_call.1
$region0: #{tpu_custom_call.1}
  #allocation0 [shape = 'u32[]', space=smem, size = 0x4, offset = 0x4, fixed_abs, tag = 'smem constant byte address 0x4 - core index']
  #allocation1 [shape = 'u32[144,128]{1,0:T(1,128)}', space=vmem, size = 0x12000, scoped, tag = 'internal scratch']
  %s0 = inlined_call_operand.hbm [shape: f32[2,1024], index: 0, kind: input, shape index: {}]
  %s1 = inlined_call_operand.hbm [shape: f32[2,1024], index: 1, kind: output, shape index: {}]
  %s2 = sld [smem:[#allocation0]]
  $region18: #{tpu_custom_call.1} parent=0
    _
  %s4 = ssub.s32 1, %s2
  %s5 = scalar_select 0, %s4, %s2
  $region1: #{tpu_custom_call.1} parent=0
    #allocation2 [shape = 'u8[8192]{0}', space=vmem, size = 0x2000, scoped, tag = 'input window, operand 0, single buffered']
    #allocation3 [shape = 's32[1]{0}', space=sflag, size = 0x4, scoped, tag = 'scoped memory for tpu_custom_call.1']
    #allocation4 [shape = 's32[1]{0}', space=sflag, size = 0x4, scoped, tag = 'scoped memory for tpu_custom_call.1']
    #allocation5 [shape = 'u8[8192]{0}', space=vmem, size = 0x2000, scoped, tag = 'output window, operand 0, single buffered']
    %6 = vsyncpa [#allocation3], 0
    %7 = vsyncpa [#allocation4], 0
    // Predicated region
    $region2: #{tpu_custom_call.1} parent=1 // pred_check
      _
    $region3: #{tpu_custom_call.1} parent=1 // pred_check_branch
      %9 = sbr.rel (0) target = $region5
    $region4: #{tpu_custom_call.1} parent=1 // pred_region
      %s11 = ssub.s32 256, 256
      %12 = vsyncadd [#allocation3], %s11
      %s14 = sshll.u32 [#allocation2], 4
      %s15 = int_to_ptr.vmem [resolvable:$true] %s14
      %17 = dma.hbm_to_vmem [thread:$0]  %s0, 256, %s15, [#allocation3]
    $region5: #{tpu_custom_call.1} parent=1 // pred_fallthru
      _
    // Predicated region
    $region6: #{tpu_custom_call.1} parent=1 // pred_check
      _
    $region7: #{tpu_custom_call.1} parent=1 // pred_check_branch
      %19 = sbr.rel (0) target = $region9
    $region8: #{tpu_custom_call.1} parent=1 // pred_region
      %20 = dma.done [#allocation3], 256
    $region9: #{tpu_custom_call.1} parent=1 // pred_fallthru
      _
    %v21 = vld [vmem:[#allocation2] sm:$0xff]
    %v22 = vld [vmem:[#allocation2 + $0x8] sm:$0xff]
    %v23 = vxor.u32 %v21, 2147483648
    %v24 = vxor.u32 %v22, 2147483648
    %v25 = vmul.f32 %v23, 1.442695
    %v26 = vpow.pop %v25
    %v27 = vmul.f32 %v24, 1.442695
    %v28 = vpow.pop %v27
    %v29 = vadd.f32 %v26, 1.0
    %v30 = vadd.f32 %v28, 1.0
    %v31 = vrcp.pop %v29
    %v32 = vmul.f32 1.0, %v31
    %v33 = vrcp.pop %v30
    %v34 = vmul.f32 1.0, %v33
    %35 = vst [vmem:[#allocation5] sm:$0xff] %v32
    %36 = vst [vmem:[#allocation5 + $0x8] sm:$0xff] %v34
    // Predicated region
    $region10: #{tpu_custom_call.1} parent=1 // pred_check
      _
    $region11: #{tpu_custom_call.1} parent=1 // pred_check_branch
      %38 = sbr.rel (0) target = $region13
    $region12: #{tpu_custom_call.1} parent=1 // pred_region
      %s40 = ssub.s32 256, 256
      %41 = vsyncadd [#allocation4], %s40
      %s43 = sshll.u32 [#allocation5], 4
      %s44 = int_to_ptr.vmem [resolvable:$true] %s43
      %46 = dma.vmem_to_hbm [thread:$0]  %s44, 256, %s1, [#allocation4]
    $region13: #{tpu_custom_call.1} parent=1 // pred_fallthru
      _
    // Predicated region
    $region14: #{tpu_custom_call.1} parent=1 // pred_check
      _
    $region15: #{tpu_custom_call.1} parent=1 // pred_check_branch
      %48 = sbr.rel (0) target = $region17
    $region16: #{tpu_custom_call.1} parent=1 // pred_region
      %49 = dma.done [#allocation4], 256
    $region17: #{tpu_custom_call.1} parent=1 // pred_fallthru
      _
    %50 = vsyncpa [#allocation3], 1
    %51 = vsyncpa [#allocation4], 1

</llo_original>
